<compile_context>
chip_gen: v7x
topology: tpu7x:2x2x1
jax: 0.10.0
libtpu: 0.0.40
codegen_flags: <defaults>
</compile_context>

<pallas_src>
import jax
import jax.numpy as jnp
from jax import lax
from jax.experimental import pallas as pl
from jax.experimental.pallas import tpu as pltpu


def _round_up(x, m):
    return (x + m - 1) // m * m


def _cdiv(a, b):
    return (a + b - 1) // b


def baseline_kernel(xc_ref, xv_ref,
                    w1c_ref, w1v_ref, b1_ref,
                    w2_ref, b2_ref,
                    w3t_ref, b3_ref,
                    out_ref):
    # Feature tiles are used directly in their storage dtype (no upcast
    # temporaries).  The mean over items is folded into the 1/N-scaled fc1
    # weights, so the front end is a single MXU pass per feature group.
    h1 = (jnp.dot(xc_ref[...], w1c_ref[...], preferred_element_type=jnp.float32)
          + jnp.dot(xv_ref[...], w1v_ref[...], preferred_element_type=jnp.float32)
          + b1_ref[...])
    h1 = jnp.maximum(h1, 0.0)                                   # ReLU

    h2 = (jnp.dot(h1.astype(w2_ref.dtype), w2_ref[...],
                  preferred_element_type=jnp.float32) + b2_ref[...])
    h2 = jnp.maximum(h2, 0.0)                                   # ReLU

    # Final layer emitted transposed so the output store is lane-dense:
    #   out[0, b] = sum_k w3t[0, k] * h2[b, k] + b3
    out_ref[...] = (lax.dot_general(
        w3t_ref[...], h2.astype(w3t_ref.dtype),
        dimension_numbers=(((1,), (1,)), ((), ())),
        preferred_element_type=jnp.float32) + b3_ref[...])


def baseline_forward(customer_features, vehicle_features, params,
                     *, tile_b=8192, vmem_limit_bytes=48 * 1024 * 1024):
    """customer_features: [B, Nc, Dc], vehicle_features: [B, Nv, Dv] -> [B, 1]"""
    B, Nc, Dc = customer_features.shape
    _, Nv, Dv = vehicle_features.shape
    w1, b1, w2, b2, w3, b3 = params
    E = w1.shape[1]
    E2 = w2.shape[1]

    # Compute dtype follows the feature dtype: f32 features stay f32 end to
    # end (no extra HBM cast pass, exact vs. the PyTorch module); a producer
    # that already emits bf16 features gets the native bf16 MXU path.
    compute_dtype = (jnp.bfloat16 if customer_features.dtype == jnp.bfloat16
                     else jnp.float32)

    # Fold the mean-pool into fc1: tile the per-feature weights across items
    # and scale by 1/num_items (done once on tiny host-side arrays).
    w1c = (jnp.tile(w1[:Dc], (Nc, 1)) / Nc).astype(compute_dtype)      # [Nc*Dc, E]
    w1v = (jnp.tile(w1[Dc:Dc + Dv], (Nv, 1)) / Nv).astype(compute_dtype)  # [Nv*Dv, E]
    w2c = w2.astype(compute_dtype)                                     # [E, E2]
    w3t = w3.T.astype(compute_dtype)                                   # [1, E2]
    b1f = b1.astype(jnp.float32)
    b2f = b2.astype(jnp.float32)
    b3f = b3.astype(jnp.float32)

    # Balanced batch tiling: near-equal tiles so padding never approaches a
    # full tile.  Nudge toward >=2 (even) grid steps when B is large enough so
    # both v7x TensorCores are busy on the "parallel" axis.
    n_tiles = max(1, _cdiv(B, tile_b))
    if B >= 1024 and n_tiles < 2:
        n_tiles = 2
    if n_tiles > 1 and n_tiles % 2 == 1:
        n_tiles += 1
    if n_tiles == 1:
        tb = _round_up(B, 8)            # single tile: block == full (padded) array
    else:
        tb = _round_up(_cdiv(B, n_tiles), 128)   # lane-aligned output tiles
    b_pad = _round_up(B, tb)

    # Reshape only (free); no dtype cast -> no extra HBM pass.
    xc = customer_features.reshape(B, Nc * Dc)
    xv = vehicle_features.reshape(B, Nv * Dv)
    if b_pad != B:
        xc = jnp.pad(xc, ((0, b_pad - B), (0, 0)))
        xv = jnp.pad(xv, ((0, b_pad - B), (0, 0)))

    out_t = pl.pallas_call(
        baseline_kernel,
        out_shape=jax.ShapeDtypeStruct((1, b_pad), jnp.float32),
        grid=(b_pad // tb,),
        in_specs=[
            # batch-tiled, pipelined feature streams
            pl.BlockSpec((tb, Nc * Dc), lambda b: (b, 0)),
            pl.BlockSpec((tb, Nv * Dv), lambda b: (b, 0)),
            # weights / biases: constant index_map -> stay VMEM-resident
            pl.BlockSpec((Nc * Dc, E), lambda b: (0, 0)),
            pl.BlockSpec((Nv * Dv, E), lambda b: (0, 0)),
            pl.BlockSpec((1, E), lambda b: (0, 0)),
            pl.BlockSpec((E, E2), lambda b: (0, 0)),
            pl.BlockSpec((1, E2), lambda b: (0, 0)),
            pl.BlockSpec((1, E2), lambda b: (0, 0)),
            pl.BlockSpec((1, 1), lambda b: (0, 0)),
        ],
        out_specs=pl.BlockSpec((1, tb), lambda b: (0, b)),
        compiler_params=pltpu.CompilerParams(
            dimension_semantics=("parallel",),
            vmem_limit_bytes=vmem_limit_bytes),
    )(xc, xv, w1c, w1v, b1f, w2c, b2f, w3t, b3f)

    # [1, B_pad] -> [B, 1]
    return out_t[0, :B].reshape(B, 1)


def init_params(key, cust_dim, veh_dim, embedding_dim):
    """Deterministic synthetic parameters (shapes follow BaselineModel.__init__)."""
    e = embedding_dim
    e2 = embedding_dim // 2
    ks = jax.random.split(key, 6)
    # Weights stored in (in, out) convention: y = x @ W + b
    w1 = jax.random.normal(ks[0], (cust_dim + veh_dim, e), jnp.float32) * 0.1
    b1 = jax.random.normal(ks[1], (1, e), jnp.float32) * 0.1
    w2 = jax.random.normal(ks[2], (e, e2), jnp.float32) * 0.1
    b2 = jax.random.normal(ks[3], (1, e2), jnp.float32) * 0.1
    w3 = jax.random.normal(ks[4], (e2, 1), jnp.float32) * 0.1
    b3 = jax.random.normal(ks[5], (1, 1), jnp.float32) * 0.1
    return (w1, b1, w2, b2, w3, b3)


def reference_forward(customer_features, vehicle_features, params):
    """Pure-JAX f32 reference mirroring the PyTorch forward."""
    w1, b1, w2, b2, w3, b3 = params
    avg_c = jnp.mean(customer_features.astype(jnp.float32), axis=1)
    avg_v = jnp.mean(vehicle_features.astype(jnp.float32), axis=1)
    x = jnp.concatenate([avg_c, avg_v], axis=1)
    x = jax.nn.relu(x @ w1 + b1)
    x = jax.nn.relu(x @ w2 + b2)
    return x @ w3 + b3


if __name__ == "__main__":
    # Small shapes consistent with the module: 13 + 13 = 26 = input_dim of fc1
    cust_dim, veh_dim = 13, 13
    embedding_dim = 32

    key = jax.random.PRNGKey(0)
    k_c, k_v, k_p = jax.random.split(key, 3)
    params = init_params(k_p, cust_dim, veh_dim, embedding_dim)

    # Case 1: tiny batch (single tile).
    B, Nc, Nv = 2, 5, 3
    customer_features = jax.random.normal(k_c, (B, Nc, cust_dim), jnp.float32)
    vehicle_features = jax.random.normal(k_v, (B, Nv, veh_dim), jnp.float32)

    out = baseline_forward(customer_features, vehicle_features, params)
    out = jax.block_until_ready(out)
    ref = reference_forward(customer_features, vehicle_features, params)
    assert out.shape == (B, 1)
    assert jnp.allclose(out, ref, atol=1e-4, rtol=1e-4), (out, ref)

    # Case 2: multi-tile path (exercises batch tiling, padding slice-off).
    B2 = 300
    cf2 = jax.random.normal(jax.random.PRNGKey(1), (B2, Nc, cust_dim), jnp.float32)
    vf2 = jax.random.normal(jax.random.PRNGKey(2), (B2, Nv, veh_dim), jnp.float32)
    out2 = baseline_forward(cf2, vf2, params, tile_b=128)
    out2 = jax.block_until_ready(out2)
    ref2 = reference_forward(cf2, vf2, params)
    assert out2.shape == (B2, 1)
    assert jnp.allclose(out2, ref2, atol=1e-4, rtol=1e-4)

    print("KERNEL_OK")
</pallas_src>

<mosaic_0001>
module attributes {stable_mosaic.version = 11 : i64} {
  func.func @baseline_kernel(%arg0: i32, %arg1: memref<8x65xf32, #tpu.memory_space<vmem>>, %arg2: memref<8x39xf32, #tpu.memory_space<vmem>>, %arg3: memref<65x32xf32, #tpu.memory_space<vmem>>, %arg4: memref<39x32xf32, #tpu.memory_space<vmem>>, %arg5: memref<1x32xf32, #tpu.memory_space<vmem>>, %arg6: memref<32x16xf32, #tpu.memory_space<vmem>>, %arg7: memref<1x16xf32, #tpu.memory_space<vmem>>, %arg8: memref<1x16xf32, #tpu.memory_space<vmem>>, %arg9: memref<1x1xf32, #tpu.memory_space<vmem>>, %arg10: memref<1x8xf32, #tpu.memory_space<vmem>>) attributes {dimension_semantics = [#tpu.dimension_semantics<parallel>], iteration_bounds = array<i64: 1>, scalar_prefetch = 0 : i64, scratch_operands = 0 : i64, tpu.core_type = #tpu.core_type<tc>, window_params = [{transform_indices = @transform_0, window_bounds = array<i64: 8, 65>}, {transform_indices = @transform_1, window_bounds = array<i64: 8, 39>}, {pipeline_mode = #tpu.pipeline_mode<synchronous>, transform_indices = @transform_2, window_bounds = array<i64: 65, 32>}, {pipeline_mode = #tpu.pipeline_mode<synchronous>, transform_indices = @transform_3, window_bounds = array<i64: 39, 32>}, {pipeline_mode = #tpu.pipeline_mode<synchronous>, transform_indices = @transform_4, window_bounds = array<i64: 1, 32>}, {pipeline_mode = #tpu.pipeline_mode<synchronous>, transform_indices = @transform_5, window_bounds = array<i64: 32, 16>}, {pipeline_mode = #tpu.pipeline_mode<synchronous>, transform_indices = @transform_6, window_bounds = array<i64: 1, 16>}, {pipeline_mode = #tpu.pipeline_mode<synchronous>, transform_indices = @transform_7, window_bounds = array<i64: 1, 16>}, {pipeline_mode = #tpu.pipeline_mode<synchronous>, transform_indices = @transform_8, window_bounds = array<i64: 1, 1>}, {transform_indices = @transform_9, window_bounds = array<i64: 1, 8>}]} {
    %c0 = arith.constant 0 : index
    %c0_0 = arith.constant 0 : index
    %0 = vector.load %arg1[%c0, %c0_0] : memref<8x65xf32, #tpu.memory_space<vmem>>, vector<8x65xf32>
    %c0_1 = arith.constant 0 : index
    %c0_2 = arith.constant 0 : index
    %1 = vector.load %arg3[%c0_1, %c0_2] : memref<65x32xf32, #tpu.memory_space<vmem>>, vector<65x32xf32>
    %cst = arith.constant dense<0.000000e+00> : vector<8x32xf32>
    %2 = tpu.matmul %0, %1, %cst {dimension_numbers = #tpu.dot_dimension_numbers<[1], [0], [0], [1], [0, 0, 1, 1], [], []>} : vector<8x65xf32>, vector<65x32xf32>, vector<8x32xf32> -> vector<8x32xf32>
    %c0_3 = arith.constant 0 : index
    %c0_4 = arith.constant 0 : index
    %3 = vector.load %arg2[%c0_3, %c0_4] : memref<8x39xf32, #tpu.memory_space<vmem>>, vector<8x39xf32>
    %c0_5 = arith.constant 0 : index
    %c0_6 = arith.constant 0 : index
    %4 = vector.load %arg4[%c0_5, %c0_6] : memref<39x32xf32, #tpu.memory_space<vmem>>, vector<39x32xf32>
    %cst_7 = arith.constant dense<0.000000e+00> : vector<8x32xf32>
    %5 = tpu.matmul %3, %4, %cst_7 {dimension_numbers = #tpu.dot_dimension_numbers<[1], [0], [0], [1], [0, 0, 1, 1], [], []>} : vector<8x39xf32>, vector<39x32xf32>, vector<8x32xf32> -> vector<8x32xf32>
    %6 = arith.addf %2, %5 : vector<8x32xf32>
    %c0_8 = arith.constant 0 : index
    %c0_9 = arith.constant 0 : index
    %7 = vector.load %arg5[%c0_8, %c0_9] : memref<1x32xf32, #tpu.memory_space<vmem>>, vector<1x32xf32>
    %8 = vector.broadcast %7 : vector<1x32xf32> to vector<8x32xf32>
    %9 = arith.addf %6, %8 : vector<8x32xf32>
    %cst_10 = arith.constant 0.000000e+00 : f32
    %10 = vector.broadcast %cst_10 : f32 to vector<8x32xf32>
    %11 = arith.maximumf %9, %10 : vector<8x32xf32>
    %c0_11 = arith.constant 0 : index
    %c0_12 = arith.constant 0 : index
    %12 = vector.load %arg6[%c0_11, %c0_12] : memref<32x16xf32, #tpu.memory_space<vmem>>, vector<32x16xf32>
    %cst_13 = arith.constant dense<0.000000e+00> : vector<8x16xf32>
    %13 = tpu.matmul %11, %12, %cst_13 {dimension_numbers = #tpu.dot_dimension_numbers<[1], [0], [0], [1], [0, 0, 1, 1], [], []>} : vector<8x32xf32>, vector<32x16xf32>, vector<8x16xf32> -> vector<8x16xf32>
    %c0_14 = arith.constant 0 : index
    %c0_15 = arith.constant 0 : index
    %14 = vector.load %arg7[%c0_14, %c0_15] : memref<1x16xf32, #tpu.memory_space<vmem>>, vector<1x16xf32>
    %15 = vector.broadcast %14 : vector<1x16xf32> to vector<8x16xf32>
    %16 = arith.addf %13, %15 : vector<8x16xf32>
    %cst_16 = arith.constant 0.000000e+00 : f32
    %17 = vector.broadcast %cst_16 : f32 to vector<8x16xf32>
    %18 = arith.maximumf %16, %17 : vector<8x16xf32>
    %c0_17 = arith.constant 0 : index
    %c0_18 = arith.constant 0 : index
    %19 = vector.load %arg8[%c0_17, %c0_18] : memref<1x16xf32, #tpu.memory_space<vmem>>, vector<1x16xf32>
    %cst_19 = arith.constant dense<0.000000e+00> : vector<1x8xf32>
    %20 = tpu.matmul %19, %18, %cst_19 {dimension_numbers = #tpu.dot_dimension_numbers<[1], [1], [0], [0], [0, 0, 1, 0], [], []>} : vector<1x16xf32>, vector<8x16xf32>, vector<1x8xf32> -> vector<1x8xf32>
    %c0_20 = arith.constant 0 : index
    %c0_21 = arith.constant 0 : index
    %21 = vector.load %arg9[%c0_20, %c0_21] : memref<1x1xf32, #tpu.memory_space<vmem>>, vector<1x1xf32>
    %22 = vector.broadcast %21 : vector<1x1xf32> to vector<1x8xf32>
    %23 = arith.addf %20, %22 : vector<1x8xf32>
    %c0_22 = arith.constant 0 : index
    %c0_23 = arith.constant 0 : index
    %24 = vector.load %arg10[%c0_22, %c0_23] : memref<1x8xf32, #tpu.memory_space<vmem>>, vector<1x8xf32>
    tpu.vector_store %arg10[%c0_22, %c0_23], %23 {strides = array<i32>} : memref<1x8xf32, #tpu.memory_space<vmem>>, vector<1x8xf32>,
    return
  }
  func.func @transform_0(%arg0: i32) -> (i32, i32) {
    %c0_i32 = arith.constant 0 : i32
    %c0_i32_0 = arith.constant 0 : i32
    return %arg0, %c0_i32 : i32, i32
  }
  func.func @transform_1(%arg0: i32) -> (i32, i32) {
    %c0_i32 = arith.constant 0 : i32
    %c0_i32_0 = arith.constant 0 : i32
    return %arg0, %c0_i32 : i32, i32
  }
  func.func @transform_2(%arg0: i32) -> (i32, i32) {
    %c0_i32 = arith.constant 0 : i32
    %c0_i32_0 = arith.constant 0 : i32
    %c0_i32_1 = arith.constant 0 : i32
    return %c0_i32, %c0_i32_0 : i32, i32
  }
  func.func @transform_3(%arg0: i32) -> (i32, i32) {
    %c0_i32 = arith.constant 0 : i32
    %c0_i32_0 = arith.constant 0 : i32
    %c0_i32_1 = arith.constant 0 : i32
    return %c0_i32, %c0_i32_0 : i32, i32
  }
  func.func @transform_4(%arg0: i32) -> (i32, i32) {
    %c0_i32 = arith.constant 0 : i32
    %c0_i32_0 = arith.constant 0 : i32
    %c0_i32_1 = arith.constant 0 : i32
    return %c0_i32, %c0_i32_0 : i32, i32
  }
  func.func @transform_5(%arg0: i32) -> (i32, i32) {
    %c0_i32 = arith.constant 0 : i32
    %c0_i32_0 = arith.constant 0 : i32
    %c0_i32_1 = arith.constant 0 : i32
    return %c0_i32, %c0_i32_0 : i32, i32
  }
  func.func @transform_6(%arg0: i32) -> (i32, i32) {
    %c0_i32 = arith.constant 0 : i32
    %c0_i32_0 = arith.constant 0 : i32
    %c0_i32_1 = arith.constant 0 : i32
    return %c0_i32, %c0_i32_0 : i32, i32
  }
  func.func @transform_7(%arg0: i32) -> (i32, i32) {
    %c0_i32 = arith.constant 0 : i32
    %c0_i32_0 = arith.constant 0 : i32
    %c0_i32_1 = arith.constant 0 : i32
    return %c0_i32, %c0_i32_0 : i32, i32
  }
  func.func @transform_8(%arg0: i32) -> (i32, i32) {
    %c0_i32 = arith.constant 0 : i32
    %c0_i32_0 = arith.constant 0 : i32
    %c0_i32_1 = arith.constant 0 : i32
    return %c0_i32, %c0_i32_0 : i32, i32
  }
  func.func @transform_9(%arg0: i32) -> (i32, i32) {
    %c0_i32 = arith.constant 0 : i32
    %c0_i32_0 = arith.constant 0 : i32
    return %c0_i32, %arg0 : i32, i32
  }
}

</mosaic_0001>

<llo_original>
// kernel: tpu_custom_call.1
$region0: #{tpu_custom_call.1}
  #allocation0 [shape = 'u32[]', space=smem, size = 0x4, offset = 0x4, fixed_abs, tag = 'smem constant byte address 0x4 - core index']
  #allocation1 [shape = 'u32[144,128]{1,0:T(1,128)}', space=vmem, size = 0x12000, scoped, tag = 'internal scratch']
  #allocation2 [shape = 'f32[1,1]{1,0:T(1,128)S(1)}', space=vmem, size = 0x200, scoped, tag = 'scoped memory for tpu_custom_call.1']
  %s0 = inlined_call_operand.vmem [shape: f32[8,65], index: 0, kind: input, shape index: {}]
  %s1 = inlined_call_operand.vmem [shape: f32[8,39], index: 1, kind: input, shape index: {}]
  %s2 = inlined_call_operand.vmem [shape: f32[65,32], index: 2, kind: input, shape index: {}]
  %s3 = inlined_call_operand.vmem [shape: f32[39,32], index: 3, kind: input, shape index: {}]
  %s4 = inlined_call_operand.vmem [shape: f32[1,32], index: 4, kind: input, shape index: {}]
  %s5 = inlined_call_operand.vmem [shape: f32[32,16], index: 5, kind: input, shape index: {}]
  %s6 = inlined_call_operand.vmem [shape: f32[1,16], index: 6, kind: input, shape index: {}]
  %s7 = inlined_call_operand.vmem [shape: f32[1,16], index: 7, kind: input, shape index: {}]
  %s8 = inlined_call_operand.<no memory space> [shape: f32[1,1], index: 8, kind: input, shape index: {}]
  %s9 = inlined_call_operand.hbm [shape: f32[1,8], index: 9, kind: output, shape index: {}]
  %s10 = sld [smem:[#allocation0]]
  $region46: #{tpu_custom_call.1} parent=0
    _
  %s12 = ssub.s32 1, %s10
  %s13 = scalar_select 0, %s12, %s10
  %v14 = vstv %s8
  %15 = vst [vmem:[#allocation2] sm:$0x1] %v14
  $region1: #{tpu_custom_call.1} parent=0
    #allocation3 [shape = 'u8[512]{0}', space=vmem, size = 0x400, scoped, tag = 'output window, operand 0, single buffered']
    #allocation4 [shape = 's32[1]{0}', space=sflag, size = 0x4, scoped, tag = 'scoped memory for tpu_custom_call.1']
    %16 = vsyncpa [#allocation4], 0
    // Predicated region
    $region2: #{tpu_custom_call.1} parent=1 // pred_check
      _
    $region3: #{tpu_custom_call.1} parent=1 // pred_check_branch
      %18 = sbr.rel (0) target = $region5
    $region4: #{tpu_custom_call.1} parent=1 // pred_region
      _
    $region5: #{tpu_custom_call.1} parent=1 // pred_fallthru
      _
    // Predicated region
    $region6: #{tpu_custom_call.1} parent=1 // pred_check
      _
    $region7: #{tpu_custom_call.1} parent=1 // pred_check_branch
      %20 = sbr.rel (0) target = $region9
    $region8: #{tpu_custom_call.1} parent=1 // pred_region
      _
    $region9: #{tpu_custom_call.1} parent=1 // pred_fallthru
      _
    // Predicated region
    $region10: #{tpu_custom_call.1} parent=1 // pred_check
      _
    $region11: #{tpu_custom_call.1} parent=1 // pred_check_branch
      %22 = sbr.rel (0) target = $region13
    $region12: #{tpu_custom_call.1} parent=1 // pred_region
      _
    $region13: #{tpu_custom_call.1} parent=1 // pred_fallthru
      _
    // Predicated region
    $region14: #{tpu_custom_call.1} parent=1 // pred_check
      _
    $region15: #{tpu_custom_call.1} parent=1 // pred_check_branch
      %24 = sbr.rel (0) target = $region17
    $region16: #{tpu_custom_call.1} parent=1 // pred_region
      _
    $region17: #{tpu_custom_call.1} parent=1 // pred_fallthru
      _
    // Predicated region
    $region18: #{tpu_custom_call.1} parent=1 // pred_check
      _
    $region19: #{tpu_custom_call.1} parent=1 // pred_check_branch
      %26 = sbr.rel (0) target = $region21
    $region20: #{tpu_custom_call.1} parent=1 // pred_region
      _
    $region21: #{tpu_custom_call.1} parent=1 // pred_fallthru
      _
    // Predicated region
    $region22: #{tpu_custom_call.1} parent=1 // pred_check
      _
    $region23: #{tpu_custom_call.1} parent=1 // pred_check_branch
      %28 = sbr.rel (0) target = $region25
    $region24: #{tpu_custom_call.1} parent=1 // pred_region
      _
    $region25: #{tpu_custom_call.1} parent=1 // pred_fallthru
      _
    // Predicated region
    $region26: #{tpu_custom_call.1} parent=1 // pred_check
      _
    $region27: #{tpu_custom_call.1} parent=1 // pred_check_branch
      %30 = sbr.rel (0) target = $region29
    $region28: #{tpu_custom_call.1} parent=1 // pred_region
      _
    $region29: #{tpu_custom_call.1} parent=1 // pred_fallthru
      _
    // Predicated region
    $region30: #{tpu_custom_call.1} parent=1 // pred_check
      _
    $region31: #{tpu_custom_call.1} parent=1 // pred_check_branch
      %32 = sbr.rel (0) target = $region33
    $region32: #{tpu_custom_call.1} parent=1 // pred_region
      _
    $region33: #{tpu_custom_call.1} parent=1 // pred_fallthru
      _
    // Predicated region
    $region34: #{tpu_custom_call.1} parent=1 // pred_check
      _
    $region35: #{tpu_custom_call.1} parent=1 // pred_check_branch
      %34 = sbr.rel (0) target = $region37
    $region36: #{tpu_custom_call.1} parent=1 // pred_region
      _
    $region37: #{tpu_custom_call.1} parent=1 // pred_fallthru
      _
    %v35 = vld [vmem:[%s0] sm:$0xff]
    %v36 = vld [vmem:[%s2] sm:$0xff]
    %v37 = vld [vmem:[%s2 + $0x8] sm:$0xff]
    %v38 = vld [vmem:[%s2 + $0x10] sm:$0xff]
    %v39 = vld [vmem:[%s2 + $0x18] sm:$0xff]
    %v40 = vld [vmem:[%s2 + $0x20] sm:$0xff]
    %v41 = vld [vmem:[%s2 + $0x28] sm:$0xff]
    %v42 = vld [vmem:[%s2 + $0x30] sm:$0xff]
    %v43 = vld [vmem:[%s2 + $0x38] sm:$0xff]
    %v44 = vld [vmem:[%s2 + $0x40] sm:$0x1]
    %v45 = vld [vmem:[%s1] sm:$0xff]
    %v46 = vld [vmem:[%s3] sm:$0xff]
    %v47 = vld [vmem:[%s3 + $0x8] sm:$0xff]
    %v48 = vld [vmem:[%s3 + $0x10] sm:$0xff]
    %v49 = vld [vmem:[%s3 + $0x18] sm:$0xff]
    %v50 = vld [vmem:[%s3 + $0x20] sm:$0x7f]
    %vm51 = vcmask 318464
    %v53 = vsel %vm51, %v45, 0
    %vm55 = vcmask 1046528
    %v57 = vsel %vm55, %v50, 0
    %59 = vmatprep.subr.mxu0 0.0
    %60 = vmatpush1.msra.mxu0 %v46
    %61 = vmatprep.subr.mxu0 0.0
    %62 = vmatpush1.msra.mxu0 %v47
    %63 = vmatprep.subr.mxu0 0.0
    %64 = vmatpush1.msra.mxu0 %v48
    %65 = vmatprep.subr.mxu0 0.0
    %66 = vmatpush1.msra.mxu0 %v49
    %67 = vmatprep.subr.mxu0 0.0
    %68 = vmatpush1.msra.mxu0 %v57
    %69 = vmatprep.subr.mxu0 0.0
    %70 = vmatpush1.msra.mxu0 0.0
    %71 = vmatprep.subr.mxu0 0.0
    %72 = vmatpush1.msra.mxu0 0.0
    %73 = vmatprep.subr.mxu0 0.0
    %74 = vmatpush1.msra.mxu0 0.0
    %75 = vmatprep.subr.mxu0 0.0
    %76 = vmatpush1.msra.mxu0 0.0
    %77 = vmatprep.subr.mxu0 0.0
    %78 = vmatpush1.msra.mxu0 0.0
    %79 = vmatprep.subr.mxu0 0.0
    %80 = vmatpush1.msra.mxu0 0.0
    %81 = vmatprep.subr.mxu0 0.0
    %82 = vmatpush1.msra.mxu0 0.0
    %83 = vmatprep.subr.mxu0 0.0
    %84 = vmatpush1.msra.mxu0 0.0
    %85 = vmatprep.subr.mxu0 0.0
    %86 = vmatpush1.msra.mxu0 0.0
    %87 = vmatprep.subr.mxu0 0.0
    %88 = vmatpush1.msra.mxu0 0.0
    %89 = vmatprep.subr.mxu0 0.0
    %90 = vmatpush1.msra.mxu0 0.0
    %91 = vmatprep.subr.mxu0 0.0
    %92 = vmatpush1.msra.mxu0 0.0
    %93 = vmatprep.subr.mxu0 0.0
    %94 = vmatpush1.msra.mxu0 0.0
    %95 = vmatprep.subr.mxu0 0.0
    %96 = vmatpush1.msra.mxu0 0.0
    %97 = vmatprep.subr.mxu0 0.0
    %98 = vmatpush1.msra.mxu0 0.0
    %99 = vmatprep.subr.mxu0 0.0
    %100 = vmatpush1.msra.mxu0 0.0
    %101 = vmatprep.subr.mxu0 0.0
    %102 = vmatpush1.msra.mxu0 0.0
    %103 = vmatprep.subr.mxu0 0.0
    %104 = vmatpush1.msra.mxu0 0.0
    %105 = vmatprep.subr.mxu0 0.0
    %106 = vmatpush1.msra.mxu0 0.0
    %107 = vmatprep.subr.mxu0 0.0
    %108 = vmatpush1.msra.mxu0 0.0
    %109 = vmatprep.subr.mxu0 0.0
    %110 = vmatpush1.msra.mxu0 0.0
    %111 = vmatprep.subr.mxu0 0.0
    %112 = vmatpush1.msra.mxu0 0.0
    %113 = vmatprep.subr.mxu0 0.0
    %114 = vmatpush1.msra.mxu0 0.0
    %115 = vmatprep.subr.mxu0 0.0
    %116 = vmatpush1.msra.mxu0 0.0
    %117 = vmatprep.subr.mxu0 0.0
    %118 = vmatpush1.msra.mxu0 0.0
    %119 = vmatprep.subr.mxu0 0.0
    %120 = vmatpush1.msra.mxu0 0.0
    %121 = vmatprep.subr.mxu0 0.0
    %122 = vmatpush1.msra.mxu0 0.0
    %123 = vmatprep.mubr.f32.mxu0 0.0
    %124 = vmatmul.mubr.f32.gmra.mrb[0].mxu0 %v53
    %v125 = vpop.f32.mrb[0].mxu0
    %v126 = vadd.f32 0.0, %v125
    %v127 = vpop.f32.mrb[0].mxu0
    %128 = vdwg.mxu0
    %vm129 = vcmask 531456
    %v131 = vsel %vm129, %v35, 0
    %vm133 = vcmask 1040384
    %v135 = vsel %vm133, %v44, 0
    %137 = vmatprep.subr.mxu0 0.0
    %138 = vmatpush1.msra.mxu0 %v36
    %139 = vmatprep.subr.mxu0 0.0
    %140 = vmatpush1.msra.mxu0 %v37
    %141 = vmatprep.subr.mxu0 0.0
    %142 = vmatpush1.msra.mxu0 %v38
    %143 = vmatprep.subr.mxu0 0.0
    %144 = vmatpush1.msra.mxu0 %v39
    %145 = vmatprep.subr.mxu0 0.0
    %146 = vmatpush1.msra.mxu0 %v40
    %147 = vmatprep.subr.mxu0 0.0
    %148 = vmatpush1.msra.mxu0 %v41
    %149 = vmatprep.subr.mxu0 0.0
    %150 = vmatpush1.msra.mxu0 %v42
    %151 = vmatprep.subr.mxu0 0.0
    %152 = vmatpush1.msra.mxu0 %v43
    %153 = vmatprep.subr.mxu0 0.0
    %154 = vmatpush1.msra.mxu0 %v135
    %155 = vmatprep.subr.mxu0 0.0
    %156 = vmatpush1.msra.mxu0 0.0
    %157 = vmatprep.subr.mxu0 0.0
    %158 = vmatpush1.msra.mxu0 0.0
    %159 = vmatprep.subr.mxu0 0.0
    %160 = vmatpush1.msra.mxu0 0.0
    %161 = vmatprep.subr.mxu0 0.0
    %162 = vmatpush1.msra.mxu0 0.0
    %163 = vmatprep.subr.mxu0 0.0
    %164 = vmatpush1.msra.mxu0 0.0
    %165 = vmatprep.subr.mxu0 0.0
    %166 = vmatpush1.msra.mxu0 0.0
    %167 = vmatprep.subr.mxu0 0.0
    %168 = vmatpush1.msra.mxu0 0.0
    %169 = vmatprep.subr.mxu0 0.0
    %170 = vmatpush1.msra.mxu0 0.0
    %171 = vmatprep.subr.mxu0 0.0
    %172 = vmatpush1.msra.mxu0 0.0
    %173 = vmatprep.subr.mxu0 0.0
    %174 = vmatpush1.msra.mxu0 0.0
    %175 = vmatprep.subr.mxu0 0.0
    %176 = vmatpush1.msra.mxu0 0.0
    %177 = vmatprep.subr.mxu0 0.0
    %178 = vmatpush1.msra.mxu0 0.0
    %179 = vmatprep.subr.mxu0 0.0
    %180 = vmatpush1.msra.mxu0 0.0
    %181 = vmatprep.subr.mxu0 0.0
    %182 = vmatpush1.msra.mxu0 0.0
    %183 = vmatprep.subr.mxu0 0.0
    %184 = vmatpush1.msra.mxu0 0.0
    %185 = vmatprep.subr.mxu0 0.0
    %186 = vmatpush1.msra.mxu0 0.0
    %187 = vmatprep.subr.mxu0 0.0
    %188 = vmatpush1.msra.mxu0 0.0
    %189 = vmatprep.subr.mxu0 0.0
    %190 = vmatpush1.msra.mxu0 0.0
    %191 = vmatprep.subr.mxu0 0.0
    %192 = vmatpush1.msra.mxu0 0.0
    %193 = vmatprep.subr.mxu0 0.0
    %194 = vmatpush1.msra.mxu0 0.0
    %195 = vmatprep.subr.mxu0 0.0
    %196 = vmatpush1.msra.mxu0 0.0
    %197 = vmatprep.subr.mxu0 0.0
    %198 = vmatpush1.msra.mxu0 0.0
    %199 = vmatprep.subr.mxu0 0.0
    %200 = vmatpush1.msra.mxu0 0.0
    %201 = vmatprep.mubr.f32.mxu0 0.0
    %202 = vmatmul.mubr.f32.gmra.mrb[0].mxu0 %v131
    %v203 = vpop.f32.mrb[0].mxu0
    %v204 = vadd.f32 %v126, %v203
    %v205 = vpop.f32.mrb[0].mxu0
    %206 = vdwg.mxu0
    %v207 = vld [vmem:[%s4] sm:$0x1]
    %v209 = vlaneseq
    %v210 = vshrl.u32 %v209, 7
    %v211 = vsub.s32 0, %v210
    %v212 = vrot.slane %v207, %v211
    %v214 = vadd.f32 %v204, %v212
    %v215 = vmax.f32 %v214, 0.0
    %v216 = vld [vmem:[%s5] sm:$0xff]
    %v217 = vld [vmem:[%s5 + $0x8] sm:$0xff]
    %v218 = vld [vmem:[%s5 + $0x10] sm:$0xff]
    %v219 = vld [vmem:[%s5 + $0x18] sm:$0xff]
    %v220 = vld [vmem:[%s6] sm:$0x1]
    %v222 = vlaneseq
    %v223 = vshrl.u32 %v222, 7
    %v224 = vsub.s32 0, %v223
    %v225 = vrot.slane %v220, %v224
    %vm227 = vcmask 261120
    %v229 = vsel %vm227, %v215, 0
    %231 = vmatprep.subr.mxu0 0.0
    %232 = vmatpush1.msra.mxu0 %v216
    %233 = vmatprep.subr.mxu0 0.0
    %234 = vmatpush1.msra.mxu0 %v217
    %235 = vmatprep.subr.mxu0 0.0
    %236 = vmatpush1.msra.mxu0 %v218
    %237 = vmatprep.subr.mxu0 0.0
    %238 = vmatpush1.msra.mxu0 %v219
    %239 = vmatprep.subr.mxu0 0.0
    %240 = vmatpush1.msra.mxu0 0.0
    %241 = vmatprep.subr.mxu0 0.0
    %242 = vmatpush1.msra.mxu0 0.0
    %243 = vmatprep.subr.mxu0 0.0
    %244 = vmatpush1.msra.mxu0 0.0
    %245 = vmatprep.subr.mxu0 0.0
    %246 = vmatpush1.msra.mxu0 0.0
    %247 = vmatprep.subr.mxu0 0.0
    %248 = vmatpush1.msra.mxu0 0.0
    %249 = vmatprep.subr.mxu0 0.0
    %250 = vmatpush1.msra.mxu0 0.0
    %251 = vmatprep.subr.mxu0 0.0
    %252 = vmatpush1.msra.mxu0 0.0
    %253 = vmatprep.subr.mxu0 0.0
    %254 = vmatpush1.msra.mxu0 0.0
    %255 = vmatprep.subr.mxu0 0.0
    %256 = vmatpush1.msra.mxu0 0.0
    %257 = vmatprep.subr.mxu0 0.0
    %258 = vmatpush1.msra.mxu0 0.0
    %259 = vmatprep.subr.mxu0 0.0
    %260 = vmatpush1.msra.mxu0 0.0
    %261 = vmatprep.subr.mxu0 0.0
    %262 = vmatpush1.msra.mxu0 0.0
    %263 = vmatprep.subr.mxu0 0.0
    %264 = vmatpush1.msra.mxu0 0.0
    %265 = vmatprep.subr.mxu0 0.0
    %266 = vmatpush1.msra.mxu0 0.0
    %267 = vmatprep.subr.mxu0 0.0
    %268 = vmatpush1.msra.mxu0 0.0
    %269 = vmatprep.subr.mxu0 0.0
    %270 = vmatpush1.msra.mxu0 0.0
    %271 = vmatprep.subr.mxu0 0.0
    %272 = vmatpush1.msra.mxu0 0.0
    %273 = vmatprep.subr.mxu0 0.0
    %274 = vmatpush1.msra.mxu0 0.0
    %275 = vmatprep.subr.mxu0 0.0
    %276 = vmatpush1.msra.mxu0 0.0
    %277 = vmatprep.subr.mxu0 0.0
    %278 = vmatpush1.msra.mxu0 0.0
    %279 = vmatprep.subr.mxu0 0.0
    %280 = vmatpush1.msra.mxu0 0.0
    %281 = vmatprep.subr.mxu0 0.0
    %282 = vmatpush1.msra.mxu0 0.0
    %283 = vmatprep.subr.mxu0 0.0
    %284 = vmatpush1.msra.mxu0 0.0
    %285 = vmatprep.subr.mxu0 0.0
    %286 = vmatpush1.msra.mxu0 0.0
    %287 = vmatprep.subr.mxu0 0.0
    %288 = vmatpush1.msra.mxu0 0.0
    %289 = vmatprep.subr.mxu0 0.0
    %290 = vmatpush1.msra.mxu0 0.0
    %291 = vmatprep.subr.mxu0 0.0
    %292 = vmatpush1.msra.mxu0 0.0
    %293 = vmatprep.subr.mxu0 0.0
    %294 = vmatpush1.msra.mxu0 0.0
    %295 = vmatprep.mubr.f32.mxu0 0.0
    %296 = vmatmul.mubr.f32.gmra.mrb[0].mxu0 %v229
    %v297 = vpop.f32.mrb[0].mxu0
    %v298 = vadd.f32 %v225, %v297
    %v299 = vpop.f32.mrb[0].mxu0
    %300 = vdwg.mxu0
    %v301 = vmax.f32 %v298, 0.0
    %v302 = vld [vmem:[%s7] sm:$0x1]
    %v303 = vld [vmem:[#allocation2] sm:$0x1]
    %305 = vset.pattern.permute.xlu0 0
    %306 = vperm.xlu0 %305, %v303
    %v307 = vpop.permute.xlu0 %306
    %v309 = vlaneseq
    %v310 = vshrl.u32 %v309, 7
    %v311 = vsub.s32 0, %v310
    %v312 = vrot.slane %v307, %v311
    %vm313 = vcmask 130048
    %v315 = vsel %vm313, %v302, 0
    %v318 = vsel %vm313, %v301, 0
    %320 = vmatprep.subr.mxu0 0.0
    %321 = vmatpush1.xpose.msra.mxu0 %v318
    %322 = vmatprep.subr.mxu0 0.0
    %323 = vmatpush1.xpose.msra.mxu0 0.0
    %324 = vmatprep.subr.mxu0 0.0
    %325 = vmatpush1.xpose.msra.mxu0 0.0
    %326 = vmatprep.subr.mxu0 0.0
    %327 = vmatpush1.xpose.msra.mxu0 0.0
    %328 = vmatprep.subr.mxu0 0.0
    %329 = vmatpush1.xpose.msra.mxu0 0.0
    %330 = vmatprep.subr.mxu0 0.0
    %331 = vmatpush1.xpose.msra.mxu0 0.0
    %332 = vmatprep.subr.mxu0 0.0
    %333 = vmatpush1.xpose.msra.mxu0 0.0
    %334 = vmatprep.subr.mxu0 0.0
    %335 = vmatpush1.xpose.msra.mxu0 0.0
    %336 = vmatprep.subr.mxu0 0.0
    %337 = vmatpush1.xpose.msra.mxu0 0.0
    %338 = vmatprep.subr.mxu0 0.0
    %339 = vmatpush1.xpose.msra.mxu0 0.0
    %340 = vmatprep.subr.mxu0 0.0
    %341 = vmatpush1.xpose.msra.mxu0 0.0
    %342 = vmatprep.subr.mxu0 0.0
    %343 = vmatpush1.xpose.msra.mxu0 0.0
    %344 = vmatprep.subr.mxu0 0.0
    %345 = vmatpush1.xpose.msra.mxu0 0.0
    %346 = vmatprep.subr.mxu0 0.0
    %347 = vmatpush1.xpose.msra.mxu0 0.0
    %348 = vmatprep.subr.mxu0 0.0
    %349 = vmatpush1.xpose.msra.mxu0 0.0
    %350 = vmatprep.subr.mxu0 0.0
    %351 = vmatpush1.xpose.msra.mxu0 0.0
    %352 = vmatprep.subr.mxu0 0.0
    %353 = vmatpush1.xpose.msra.mxu0 0.0
    %354 = vmatprep.subr.mxu0 0.0
    %355 = vmatpush1.xpose.msra.mxu0 0.0
    %356 = vmatprep.subr.mxu0 0.0
    %357 = vmatpush1.xpose.msra.mxu0 0.0
    %358 = vmatprep.subr.mxu0 0.0
    %359 = vmatpush1.xpose.msra.mxu0 0.0
    %360 = vmatprep.subr.mxu0 0.0
    %361 = vmatpush1.xpose.msra.mxu0 0.0
    %362 = vmatprep.subr.mxu0 0.0
    %363 = vmatpush1.xpose.msra.mxu0 0.0
    %364 = vmatprep.subr.mxu0 0.0
    %365 = vmatpush1.xpose.msra.mxu0 0.0
    %366 = vmatprep.subr.mxu0 0.0
    %367 = vmatpush1.xpose.msra.mxu0 0.0
    %368 = vmatprep.subr.mxu0 0.0
    %369 = vmatpush1.xpose.msra.mxu0 0.0
    %370 = vmatprep.subr.mxu0 0.0
    %371 = vmatpush1.xpose.msra.mxu0 0.0
    %372 = vmatprep.subr.mxu0 0.0
    %373 = vmatpush1.xpose.msra.mxu0 0.0
    %374 = vmatprep.subr.mxu0 0.0
    %375 = vmatpush1.xpose.msra.mxu0 0.0
    %376 = vmatprep.subr.mxu0 0.0
    %377 = vmatpush1.xpose.msra.mxu0 0.0
    %378 = vmatprep.subr.mxu0 0.0
    %379 = vmatpush1.xpose.msra.mxu0 0.0
    %380 = vmatprep.subr.mxu0 0.0
    %381 = vmatpush1.xpose.msra.mxu0 0.0
    %382 = vmatprep.subr.mxu0 0.0
    %383 = vmatpush1.xpose.msra.mxu0 0.0
    %384 = vmatprep.mubr.f32.mxu0 0.0
    %385 = vmatmul.mubr.f32.gmra.mrb[0].mxu0 %v315
    %v386 = vpop.f32.mrb[0].mxu0
    %v387 = vadd.f32 %v312, %v386
    %v388 = vpop.f32.mrb[0].mxu0
    %389 = vdwg.mxu0
    %vm390 = vcmask 57344
    %391 = vst.msk [vmem:[#allocation3] sm:$0x1] %vm390, %v387
    // Predicated region
    $region38: #{tpu_custom_call.1} parent=1 // pred_check
      _
    $region39: #{tpu_custom_call.1} parent=1 // pred_check_branch
      %393 = sbr.rel (0) target = $region41
    $region40: #{tpu_custom_call.1} parent=1 // pred_region
      %s395 = ssub.s32 16, 16
      %396 = vsyncadd [#allocation4], %s395
      %s398 = sshll.u32 [#allocation3], 4
      %s399 = int_to_ptr.vmem [resolvable:$true] %s398
      %401 = dma.vmem_to_hbm [thread:$0]  %s399, 16, %s9, [#allocation4]
    $region41: #{tpu_custom_call.1} parent=1 // pred_fallthru
      _
    // Predicated region
    $region42: #{tpu_custom_call.1} parent=1 // pred_check
      _
    $region43: #{tpu_custom_call.1} parent=1 // pred_check_branch
      %403 = sbr.rel (0) target = $region45
    $region44: #{tpu_custom_call.1} parent=1 // pred_region
      %404 = dma.done [#allocation4], 16
    $region45: #{tpu_custom_call.1} parent=1 // pred_fallthru
      _
    %405 = vsyncpa [#allocation4], 1

</llo_original>
